<compile_context>
chip_gen: v7x
topology: tpu7x:2x2x1
jax: 0.10.0
libtpu: 0.0.40
codegen_flags: <defaults>
</compile_context>

<pallas_src>
import functools

import jax
import jax.numpy as jnp
from jax.experimental import pallas as pl
from jax.experimental.pallas import tpu as pltpu


def _round_up(x, m):
    return (x + m - 1) // m * m


def _vmem_capacity_bytes():
    try:
        return int(pltpu.get_tpu_info().vmem_capacity_bytes)
    except Exception:
        return 64 * 1024 * 1024   # conservative (v7x-sized) fallback


def _mlp_kernel(x_ref, w1_ref, b1_ref, w2_ref, b2_ref, w3_ref, b3_ref, o_ref,
                *, apply_sigmoid: bool):
    x = x_ref[...]
    # fc1 + relu1 (MXU accumulates in f32; bias add / ReLU stay f32 — v5e has no bf16 VPU)
    h1 = jnp.dot(x, w1_ref[...], preferred_element_type=jnp.float32) + b1_ref[...]
    h1 = jnp.maximum(h1, 0.0).astype(x.dtype)
    # fc2 + relu2
    h2 = jnp.dot(h1, w2_ref[...], preferred_element_type=jnp.float32) + b2_ref[...]
    h2 = jnp.maximum(h2, 0.0).astype(x.dtype)
    # fc3 (+ optional sigmoid, matches is_classification=True path)
    out = jnp.dot(h2, w3_ref[...], preferred_element_type=jnp.float32) + b3_ref[...]
    if apply_sigmoid:
        out = jax.nn.sigmoid(out)
    o_ref[...] = out.astype(o_ref.dtype)


@functools.partial(jax.jit,
                   static_argnames=("is_classification", "tile_b", "out_dtype"))
def three_layer_relu_net(x, params, *, is_classification: bool = False,
                         tile_b=None, out_dtype=jnp.float32):
    """Fused forward pass.

    `params` = (w1, b1, w2, b2, w3, b3) with w_i: [in, out] (pre-transposed vs.
    PyTorch's [out, in]) and b_i: [1, out] or [out].  Output is `out_dtype`
    [B, output_size].  Activations stream in x.dtype (pass bf16 x to halve x-side
    HBM traffic); all accumulation / elementwise is f32.
    """
    w1, b1, w2, b2, w3, b3 = params
    B, input_size = x.shape
    hidden1 = w1.shape[1]
    hidden2 = w2.shape[1]
    out_size = w3.shape[1]

    cdt = x.dtype
    f32 = jnp.float32
    out_dtype = jnp.dtype(out_dtype)

    # Weights stream in x's dtype (tiny, VMEM-resident); biases stay f32.
    w1_c, w2_c, w3_c = (w.astype(cdt) for w in (w1, w2, w3))
    b1_c, b2_c, b3_c = (b.reshape(1, -1).astype(f32) for b in (b1, b2, b3))

    # --- batch tiling ---------------------------------------------------------
    # bf16 packs two rows per sublane -> 16-row granularity; f32 -> 8.
    sub = 16 if jnp.dtype(cdt).itemsize == 2 else 8
    if tile_b is None:
        if B >= 16 * sub:
            # HBM-bound: big tiles amortise the ~0.35 us/step overhead, but keep
            # >= 2 grid steps so v7x's two TensorCores both get work.
            n_steps = max(2, pl.cdiv(B, 1024))
            tb = pl.cdiv(B, n_steps)
        else:
            tb = B
    else:
        tb = int(tile_b)
    tb = max(sub, min(_round_up(tb, sub), _round_up(B, sub)))

    # --- VMEM budget (generation-dependent) -----------------------------------
    x_item = jnp.dtype(cdt).itemsize
    o_item = out_dtype.itemsize
    weight_bytes = ((w1_c.size + w2_c.size + w3_c.size) * x_item
                    + (b1_c.size + b2_c.size + b3_c.size) * 4)
    cap = _vmem_capacity_bytes()
    hard_cap = max(16 << 20, min(int(cap * 0.75), cap - (24 << 20)))

    def _need(t):
        # Every operand is double-buffered by the pipeline (including the
        # constant-index weight blocks), plus scheduler headroom.
        return (2 * t * (input_size * x_item + out_size * o_item)
                + 2 * weight_bytes + (2 << 20))

    while _need(tb) > hard_cap and tb > sub:
        tb = max(sub, _round_up(tb // 2, sub))

    grid = (pl.cdiv(B, tb),)
    vmem_limit = int(min(hard_cap, max(4 << 20, _need(tb))))

    kernel = functools.partial(_mlp_kernel, apply_sigmoid=is_classification)

    const = lambda i: (0, 0)   # weights/biases: same block every step -> stay resident
    in_specs = [
        pl.BlockSpec((tb, input_size), lambda i: (i, 0)),   # x: tiled over batch
        pl.BlockSpec((input_size, hidden1), const),
        pl.BlockSpec((1, hidden1), const),
        pl.BlockSpec((hidden1, hidden2), const),
        pl.BlockSpec((1, hidden2), const),
        pl.BlockSpec((hidden2, out_size), const),
        pl.BlockSpec((1, out_size), const),
    ]
    # Output block covers the full feature dim: minimal writeback bytes; OOB rows of
    # the partial last block are masked on write.
    out_spec = pl.BlockSpec((tb, out_size), lambda i: (i, 0))

    flops = 2 * B * (input_size * hidden1 + hidden1 * hidden2 + hidden2 * out_size)
    cost = pl.CostEstimate(
        flops=flops,
        transcendentals=B * out_size if is_classification else 0,
        bytes_accessed=B * input_size * x_item + B * out_size * o_item + weight_bytes,
    )

    return pl.pallas_call(
        kernel,
        out_shape=jax.ShapeDtypeStruct((B, out_size), out_dtype),
        grid=grid,
        in_specs=in_specs,
        out_specs=out_spec,
        compiler_params=pltpu.CompilerParams(
            dimension_semantics=("parallel",),   # batch tiles shard across TCs on v7x
            vmem_limit_bytes=vmem_limit,
        ),
        cost_estimate=cost,
    )(x, w1_c, b1_c, w2_c, b2_c, w3_c, b3_c)


def init_params(key, input_size, hidden1, hidden2, output_size):
    """Deterministic init mimicking nn.Linear's uniform(-1/sqrt(fan_in), 1/sqrt(fan_in))."""
    keys = jax.random.split(key, 6)

    def linear(kw, kb, fan_in, fan_out):
        bound = 1.0 / jnp.sqrt(fan_in)
        # stored as [in, out] (transpose of PyTorch's [out, in]) for direct x @ W
        w = jax.random.uniform(kw, (fan_in, fan_out), jnp.float32, -bound, bound)
        b = jax.random.uniform(kb, (1, fan_out), jnp.float32, -bound, bound)
        return w, b

    w1, b1 = linear(keys[0], keys[1], input_size, hidden1)
    w2, b2 = linear(keys[2], keys[3], hidden1, hidden2)
    w3, b3 = linear(keys[4], keys[5], hidden2, output_size)
    return (w1, b1, w2, b2, w3, b3)


def _reference(x, params, is_classification):
    w1, b1, w2, b2, w3, b3 = params
    h1 = jnp.maximum(x @ w1 + b1, 0.0)
    h2 = jnp.maximum(h1 @ w2 + b2, 0.0)
    out = h2 @ w3 + b3
    if is_classification:
        out = jax.nn.sigmoid(out)
    return out


# TODO(synk): UsefulModel.serialise / reset_parameters are host-side utilities with no
# kernel equivalent; only the forward pass is implemented here.

if __name__ == "__main__":
    input_size, hidden1, hidden2, output_size = 16, 32, 32, 8

    key = jax.random.PRNGKey(0)
    k_x, k_x2, k_p = jax.random.split(key, 3)
    params = init_params(k_p, input_size, hidden1, hidden2, output_size)

    # 1) Small regression batch (no sigmoid), f32 — single-tile path.
    x = jax.random.normal(k_x, (8, input_size), dtype=jnp.float32)
    out = jax.block_until_ready(three_layer_relu_net(x, params, is_classification=False))
    ref = _reference(x, params, False)
    assert out.shape == (8, output_size)
    assert jnp.allclose(out, ref, atol=1e-5, rtol=1e-5), "f32 regression path mismatch"

    # 2) Non-multiple batch + classification head — 2-step grid with partial last block.
    x2 = jax.random.normal(k_x2, (300, input_size), dtype=jnp.float32)
    out2 = jax.block_until_ready(three_layer_relu_net(x2, params, is_classification=True))
    ref2 = _reference(x2, params, True)
    assert out2.shape == (300, output_size)
    assert jnp.allclose(out2, ref2, atol=1e-5, rtol=1e-5), "f32 classification path mismatch"

    # 3) Caller-supplied bf16 activations (halves x-side HBM bytes, f32 accumulation).
    out3 = jax.block_until_ready(
        three_layer_relu_net(x2.astype(jnp.bfloat16), params, is_classification=True))
    assert out3.shape == (300, output_size)
    assert jnp.allclose(out3, ref2, atol=5e-2, rtol=5e-2), "bf16 path mismatch"

    print("KERNEL_OK")
</pallas_src>

<mosaic_0001>
module attributes {stable_mosaic.version = 11 : i64} {
  func.func @_mlp_kernel(%arg0: i32, %arg1: memref<8x16xf32, #tpu.memory_space<vmem>>, %arg2: memref<16x32xf32, #tpu.memory_space<vmem>>, %arg3: memref<1x32xf32, #tpu.memory_space<vmem>>, %arg4: memref<32x32xf32, #tpu.memory_space<vmem>>, %arg5: memref<1x32xf32, #tpu.memory_space<vmem>>, %arg6: memref<32x8xf32, #tpu.memory_space<vmem>>, %arg7: memref<1x8xf32, #tpu.memory_space<vmem>>, %arg8: memref<8x8xf32, #tpu.memory_space<vmem>>) attributes {dimension_semantics = [#tpu.dimension_semantics<parallel>], iteration_bounds = array<i64: 1>, scalar_prefetch = 0 : i64, scratch_operands = 0 : i64, tpu.core_type = #tpu.core_type<tc>, window_params = [{transform_indices = @transform_0, window_bounds = array<i64: 8, 16>}, {pipeline_mode = #tpu.pipeline_mode<synchronous>, transform_indices = @transform_1, window_bounds = array<i64: 16, 32>}, {pipeline_mode = #tpu.pipeline_mode<synchronous>, transform_indices = @transform_2, window_bounds = array<i64: 1, 32>}, {pipeline_mode = #tpu.pipeline_mode<synchronous>, transform_indices = @transform_3, window_bounds = array<i64: 32, 32>}, {pipeline_mode = #tpu.pipeline_mode<synchronous>, transform_indices = @transform_4, window_bounds = array<i64: 1, 32>}, {pipeline_mode = #tpu.pipeline_mode<synchronous>, transform_indices = @transform_5, window_bounds = array<i64: 32, 8>}, {pipeline_mode = #tpu.pipeline_mode<synchronous>, transform_indices = @transform_6, window_bounds = array<i64: 1, 8>}, {transform_indices = @transform_7, window_bounds = array<i64: 8, 8>}]} {
    %c0 = arith.constant 0 : index
    %c0_0 = arith.constant 0 : index
    %0 = vector.load %arg1[%c0, %c0_0] : memref<8x16xf32, #tpu.memory_space<vmem>>, vector<8x16xf32>
    %c0_1 = arith.constant 0 : index
    %c0_2 = arith.constant 0 : index
    %1 = vector.load %arg2[%c0_1, %c0_2] : memref<16x32xf32, #tpu.memory_space<vmem>>, vector<16x32xf32>
    %cst = arith.constant dense<0.000000e+00> : vector<8x32xf32>
    %2 = tpu.matmul %0, %1, %cst {dimension_numbers = #tpu.dot_dimension_numbers<[1], [0], [0], [1], [0, 0, 1, 1], [], []>} : vector<8x16xf32>, vector<16x32xf32>, vector<8x32xf32> -> vector<8x32xf32>
    %c0_3 = arith.constant 0 : index
    %c0_4 = arith.constant 0 : index
    %3 = vector.load %arg3[%c0_3, %c0_4] : memref<1x32xf32, #tpu.memory_space<vmem>>, vector<1x32xf32>
    %4 = vector.broadcast %3 : vector<1x32xf32> to vector<8x32xf32>
    %5 = arith.addf %2, %4 : vector<8x32xf32>
    %cst_5 = arith.constant 0.000000e+00 : f32
    %6 = vector.broadcast %cst_5 : f32 to vector<8x32xf32>
    %7 = arith.maximumf %5, %6 : vector<8x32xf32>
    %c0_6 = arith.constant 0 : index
    %c0_7 = arith.constant 0 : index
    %8 = vector.load %arg4[%c0_6, %c0_7] : memref<32x32xf32, #tpu.memory_space<vmem>>, vector<32x32xf32>
    %cst_8 = arith.constant dense<0.000000e+00> : vector<8x32xf32>
    %9 = tpu.matmul %7, %8, %cst_8 {dimension_numbers = #tpu.dot_dimension_numbers<[1], [0], [0], [1], [0, 0, 1, 1], [], []>} : vector<8x32xf32>, vector<32x32xf32>, vector<8x32xf32> -> vector<8x32xf32>
    %c0_9 = arith.constant 0 : index
    %c0_10 = arith.constant 0 : index
    %10 = vector.load %arg5[%c0_9, %c0_10] : memref<1x32xf32, #tpu.memory_space<vmem>>, vector<1x32xf32>
    %11 = vector.broadcast %10 : vector<1x32xf32> to vector<8x32xf32>
    %12 = arith.addf %9, %11 : vector<8x32xf32>
    %cst_11 = arith.constant 0.000000e+00 : f32
    %13 = vector.broadcast %cst_11 : f32 to vector<8x32xf32>
    %14 = arith.maximumf %12, %13 : vector<8x32xf32>
    %c0_12 = arith.constant 0 : index
    %c0_13 = arith.constant 0 : index
    %15 = vector.load %arg6[%c0_12, %c0_13] : memref<32x8xf32, #tpu.memory_space<vmem>>, vector<32x8xf32>
    %cst_14 = arith.constant dense<0.000000e+00> : vector<8x8xf32>
    %16 = tpu.matmul %14, %15, %cst_14 {dimension_numbers = #tpu.dot_dimension_numbers<[1], [0], [0], [1], [0, 0, 1, 1], [], []>} : vector<8x32xf32>, vector<32x8xf32>, vector<8x8xf32> -> vector<8x8xf32>
    %c0_15 = arith.constant 0 : index
    %c0_16 = arith.constant 0 : index
    %17 = vector.load %arg7[%c0_15, %c0_16] : memref<1x8xf32, #tpu.memory_space<vmem>>, vector<1x8xf32>
    %18 = vector.broadcast %17 : vector<1x8xf32> to vector<8x8xf32>
    %19 = arith.addf %16, %18 : vector<8x8xf32>
    %c0_17 = arith.constant 0 : index
    %c0_18 = arith.constant 0 : index
    %20 = vector.load %arg8[%c0_17, %c0_18] : memref<8x8xf32, #tpu.memory_space<vmem>>, vector<8x8xf32>
    tpu.vector_store %arg8[%c0_17, %c0_18], %19 {strides = array<i32>} : memref<8x8xf32, #tpu.memory_space<vmem>>, vector<8x8xf32>,
    return
  }
  func.func @transform_0(%arg0: i32) -> (i32, i32) {
    %c0_i32 = arith.constant 0 : i32
    %c0_i32_0 = arith.constant 0 : i32
    return %arg0, %c0_i32 : i32, i32
  }
  func.func @transform_1(%arg0: i32) -> (i32, i32) {
    %c0_i32 = arith.constant 0 : i32
    %c0_i32_0 = arith.constant 0 : i32
    %c0_i32_1 = arith.constant 0 : i32
    return %c0_i32, %c0_i32_0 : i32, i32
  }
  func.func @transform_2(%arg0: i32) -> (i32, i32) {
    %c0_i32 = arith.constant 0 : i32
    %c0_i32_0 = arith.constant 0 : i32
    %c0_i32_1 = arith.constant 0 : i32
    return %c0_i32, %c0_i32_0 : i32, i32
  }
  func.func @transform_3(%arg0: i32) -> (i32, i32) {
    %c0_i32 = arith.constant 0 : i32
    %c0_i32_0 = arith.constant 0 : i32
    %c0_i32_1 = arith.constant 0 : i32
    return %c0_i32, %c0_i32_0 : i32, i32
  }
  func.func @transform_4(%arg0: i32) -> (i32, i32) {
    %c0_i32 = arith.constant 0 : i32
    %c0_i32_0 = arith.constant 0 : i32
    %c0_i32_1 = arith.constant 0 : i32
    return %c0_i32, %c0_i32_0 : i32, i32
  }
  func.func @transform_5(%arg0: i32) -> (i32, i32) {
    %c0_i32 = arith.constant 0 : i32
    %c0_i32_0 = arith.constant 0 : i32
    %c0_i32_1 = arith.constant 0 : i32
    return %c0_i32, %c0_i32_0 : i32, i32
  }
  func.func @transform_6(%arg0: i32) -> (i32, i32) {
    %c0_i32 = arith.constant 0 : i32
    %c0_i32_0 = arith.constant 0 : i32
    %c0_i32_1 = arith.constant 0 : i32
    return %c0_i32, %c0_i32_0 : i32, i32
  }
  func.func @transform_7(%arg0: i32) -> (i32, i32) {
    %c0_i32 = arith.constant 0 : i32
    %c0_i32_0 = arith.constant 0 : i32
    return %arg0, %c0_i32 : i32, i32
  }
}

</mosaic_0001>

<llo_original>
// kernel: three_layer_relu_net.1
$region0: #{three_layer_relu_net.1}
  #allocation0 [shape = 'u32[]', space=smem, size = 0x4, offset = 0x4, fixed_abs, tag = 'smem constant byte address 0x4 - core index']
  #allocation1 [shape = 'u32[144,128]{1,0:T(1,128)}', space=vmem, size = 0x12000, scoped, tag = 'internal scratch']
  %s0 = inlined_call_operand.hbm [shape: f32[8,16], index: 0, kind: input, shape index: {}]
  %s1 = inlined_call_operand.vmem [shape: f32[16,32], index: 1, kind: input, shape index: {}]
  %s2 = inlined_call_operand.vmem [shape: f32[1,32], index: 2, kind: input, shape index: {}]
  %s3 = inlined_call_operand.vmem [shape: f32[32,32], index: 3, kind: input, shape index: {}]
  %s4 = inlined_call_operand.vmem [shape: f32[1,32], index: 4, kind: input, shape index: {}]
  %s5 = inlined_call_operand.vmem [shape: f32[32,8], index: 5, kind: input, shape index: {}]
  %s6 = inlined_call_operand.vmem [shape: f32[1,8], index: 6, kind: input, shape index: {}]
  %s7 = inlined_call_operand.hbm [shape: f32[8,8], index: 7, kind: output, shape index: {}]
  %s8 = sld [smem:[#allocation0]]
  $region42: #{three_layer_relu_net.1} parent=0
    _
  %s10 = ssub.s32 1, %s8
  %s11 = scalar_select 0, %s10, %s8
  $region1: #{three_layer_relu_net.1} parent=0
    #allocation2 [shape = 'u8[4096]{0}', space=vmem, size = 0x1000, scoped, tag = 'input window, operand 0, single buffered']
    #allocation3 [shape = 's32[1]{0}', space=sflag, size = 0x4, scoped, tag = 'scoped memory for three_layer_relu_net.1']
    #allocation4 [shape = 's32[1]{0}', space=sflag, size = 0x4, scoped, tag = 'scoped memory for three_layer_relu_net.1']
    #allocation5 [shape = 'u8[4096]{0}', space=vmem, size = 0x1000, scoped, tag = 'output window, operand 0, single buffered']
    %12 = vsyncpa [#allocation3], 0
    %13 = vsyncpa [#allocation4], 0
    // Predicated region
    $region2: #{three_layer_relu_net.1} parent=1 // pred_check
      _
    $region3: #{three_layer_relu_net.1} parent=1 // pred_check_branch
      %15 = sbr.rel (0) target = $region5
    $region4: #{three_layer_relu_net.1} parent=1 // pred_region
      %s17 = ssub.s32 128, 128
      %18 = vsyncadd [#allocation3], %s17
      %s20 = sshll.u32 [#allocation2], 4
      %s21 = int_to_ptr.vmem [resolvable:$true] %s20
      %23 = dma.hbm_to_vmem [thread:$0]  %s0, 128, %s21, [#allocation3]
    $region5: #{three_layer_relu_net.1} parent=1 // pred_fallthru
      _
    // Predicated region
    $region6: #{three_layer_relu_net.1} parent=1 // pred_check
      _
    $region7: #{three_layer_relu_net.1} parent=1 // pred_check_branch
      %25 = sbr.rel (0) target = $region9
    $region8: #{three_layer_relu_net.1} parent=1 // pred_region
      _
    $region9: #{three_layer_relu_net.1} parent=1 // pred_fallthru
      _
    // Predicated region
    $region10: #{three_layer_relu_net.1} parent=1 // pred_check
      _
    $region11: #{three_layer_relu_net.1} parent=1 // pred_check_branch
      %27 = sbr.rel (0) target = $region13
    $region12: #{three_layer_relu_net.1} parent=1 // pred_region
      _
    $region13: #{three_layer_relu_net.1} parent=1 // pred_fallthru
      _
    // Predicated region
    $region14: #{three_layer_relu_net.1} parent=1 // pred_check
      _
    $region15: #{three_layer_relu_net.1} parent=1 // pred_check_branch
      %29 = sbr.rel (0) target = $region17
    $region16: #{three_layer_relu_net.1} parent=1 // pred_region
      _
    $region17: #{three_layer_relu_net.1} parent=1 // pred_fallthru
      _
    // Predicated region
    $region18: #{three_layer_relu_net.1} parent=1 // pred_check
      _
    $region19: #{three_layer_relu_net.1} parent=1 // pred_check_branch
      %31 = sbr.rel (0) target = $region21
    $region20: #{three_layer_relu_net.1} parent=1 // pred_region
      _
    $region21: #{three_layer_relu_net.1} parent=1 // pred_fallthru
      _
    // Predicated region
    $region22: #{three_layer_relu_net.1} parent=1 // pred_check
      _
    $region23: #{three_layer_relu_net.1} parent=1 // pred_check_branch
      %33 = sbr.rel (0) target = $region25
    $region24: #{three_layer_relu_net.1} parent=1 // pred_region
      _
    $region25: #{three_layer_relu_net.1} parent=1 // pred_fallthru
      _
    // Predicated region
    $region26: #{three_layer_relu_net.1} parent=1 // pred_check
      _
    $region27: #{three_layer_relu_net.1} parent=1 // pred_check_branch
      %35 = sbr.rel (0) target = $region29
    $region28: #{three_layer_relu_net.1} parent=1 // pred_region
      _
    $region29: #{three_layer_relu_net.1} parent=1 // pred_fallthru
      _
    // Predicated region
    $region30: #{three_layer_relu_net.1} parent=1 // pred_check
      _
    $region31: #{three_layer_relu_net.1} parent=1 // pred_check_branch
      %37 = sbr.rel (0) target = $region33
    $region32: #{three_layer_relu_net.1} parent=1 // pred_region
      %38 = dma.done [#allocation3], 128
    $region33: #{three_layer_relu_net.1} parent=1 // pred_fallthru
      _
    %v39 = vld [vmem:[#allocation2] sm:$0xff]
    %v40 = vld [vmem:[%s1] sm:$0xff]
    %v41 = vld [vmem:[%s1 + $0x8] sm:$0xff]
    %v42 = vld [vmem:[%s2] sm:$0x1]
    %v44 = vlaneseq
    %v45 = vshrl.u32 %v44, 7
    %v46 = vsub.s32 0, %v45
    %v47 = vrot.slane %v42, %v46
    %vm49 = vcmask 130048
    %v51 = vsel %vm49, %v39, 0
    %53 = vmatprep.subr.mxu0 0.0
    %54 = vmatpush1.msra.mxu0 %v40
    %55 = vmatprep.subr.mxu0 0.0
    %56 = vmatpush1.msra.mxu0 %v41
    %57 = vmatprep.subr.mxu0 0.0
    %58 = vmatpush1.msra.mxu0 0.0
    %59 = vmatprep.subr.mxu0 0.0
    %60 = vmatpush1.msra.mxu0 0.0
    %61 = vmatprep.subr.mxu0 0.0
    %62 = vmatpush1.msra.mxu0 0.0
    %63 = vmatprep.subr.mxu0 0.0
    %64 = vmatpush1.msra.mxu0 0.0
    %65 = vmatprep.subr.mxu0 0.0
    %66 = vmatpush1.msra.mxu0 0.0
    %67 = vmatprep.subr.mxu0 0.0
    %68 = vmatpush1.msra.mxu0 0.0
    %69 = vmatprep.subr.mxu0 0.0
    %70 = vmatpush1.msra.mxu0 0.0
    %71 = vmatprep.subr.mxu0 0.0
    %72 = vmatpush1.msra.mxu0 0.0
    %73 = vmatprep.subr.mxu0 0.0
    %74 = vmatpush1.msra.mxu0 0.0
    %75 = vmatprep.subr.mxu0 0.0
    %76 = vmatpush1.msra.mxu0 0.0
    %77 = vmatprep.subr.mxu0 0.0
    %78 = vmatpush1.msra.mxu0 0.0
    %79 = vmatprep.subr.mxu0 0.0
    %80 = vmatpush1.msra.mxu0 0.0
    %81 = vmatprep.subr.mxu0 0.0
    %82 = vmatpush1.msra.mxu0 0.0
    %83 = vmatprep.subr.mxu0 0.0
    %84 = vmatpush1.msra.mxu0 0.0
    %85 = vmatprep.subr.mxu0 0.0
    %86 = vmatpush1.msra.mxu0 0.0
    %87 = vmatprep.subr.mxu0 0.0
    %88 = vmatpush1.msra.mxu0 0.0
    %89 = vmatprep.subr.mxu0 0.0
    %90 = vmatpush1.msra.mxu0 0.0
    %91 = vmatprep.subr.mxu0 0.0
    %92 = vmatpush1.msra.mxu0 0.0
    %93 = vmatprep.subr.mxu0 0.0
    %94 = vmatpush1.msra.mxu0 0.0
    %95 = vmatprep.subr.mxu0 0.0
    %96 = vmatpush1.msra.mxu0 0.0
    %97 = vmatprep.subr.mxu0 0.0
    %98 = vmatpush1.msra.mxu0 0.0
    %99 = vmatprep.subr.mxu0 0.0
    %100 = vmatpush1.msra.mxu0 0.0
    %101 = vmatprep.subr.mxu0 0.0
    %102 = vmatpush1.msra.mxu0 0.0
    %103 = vmatprep.subr.mxu0 0.0
    %104 = vmatpush1.msra.mxu0 0.0
    %105 = vmatprep.subr.mxu0 0.0
    %106 = vmatpush1.msra.mxu0 0.0
    %107 = vmatprep.subr.mxu0 0.0
    %108 = vmatpush1.msra.mxu0 0.0
    %109 = vmatprep.subr.mxu0 0.0
    %110 = vmatpush1.msra.mxu0 0.0
    %111 = vmatprep.subr.mxu0 0.0
    %112 = vmatpush1.msra.mxu0 0.0
    %113 = vmatprep.subr.mxu0 0.0
    %114 = vmatpush1.msra.mxu0 0.0
    %115 = vmatprep.subr.mxu0 0.0
    %116 = vmatpush1.msra.mxu0 0.0
    %117 = vmatprep.mubr.f32.mxu0 0.0
    %118 = vmatmul.mubr.f32.gmra.mrb[0].mxu0 %v51
    %v119 = vpop.f32.mrb[0].mxu0
    %v120 = vadd.f32 %v47, %v119
    %v121 = vpop.f32.mrb[0].mxu0
    %122 = vdwg.mxu0
    %v123 = vmax.f32 %v120, 0.0
    %v124 = vld [vmem:[%s3] sm:$0xff]
    %v125 = vld [vmem:[%s3 + $0x8] sm:$0xff]
    %v126 = vld [vmem:[%s3 + $0x10] sm:$0xff]
    %v127 = vld [vmem:[%s3 + $0x18] sm:$0xff]
    %v128 = vld [vmem:[%s4] sm:$0x1]
    %v130 = vlaneseq
    %v131 = vshrl.u32 %v130, 7
    %v132 = vsub.s32 0, %v131
    %v133 = vrot.slane %v128, %v132
    %vm135 = vcmask 261120
    %v137 = vsel %vm135, %v123, 0
    %139 = vmatprep.subr.mxu0 0.0
    %140 = vmatpush1.msra.mxu0 %v124
    %141 = vmatprep.subr.mxu0 0.0
    %142 = vmatpush1.msra.mxu0 %v125
    %143 = vmatprep.subr.mxu0 0.0
    %144 = vmatpush1.msra.mxu0 %v126
    %145 = vmatprep.subr.mxu0 0.0
    %146 = vmatpush1.msra.mxu0 %v127
    %147 = vmatprep.subr.mxu0 0.0
    %148 = vmatpush1.msra.mxu0 0.0
    %149 = vmatprep.subr.mxu0 0.0
    %150 = vmatpush1.msra.mxu0 0.0
    %151 = vmatprep.subr.mxu0 0.0
    %152 = vmatpush1.msra.mxu0 0.0
    %153 = vmatprep.subr.mxu0 0.0
    %154 = vmatpush1.msra.mxu0 0.0
    %155 = vmatprep.subr.mxu0 0.0
    %156 = vmatpush1.msra.mxu0 0.0
    %157 = vmatprep.subr.mxu0 0.0
    %158 = vmatpush1.msra.mxu0 0.0
    %159 = vmatprep.subr.mxu0 0.0
    %160 = vmatpush1.msra.mxu0 0.0
    %161 = vmatprep.subr.mxu0 0.0
    %162 = vmatpush1.msra.mxu0 0.0
    %163 = vmatprep.subr.mxu0 0.0
    %164 = vmatpush1.msra.mxu0 0.0
    %165 = vmatprep.subr.mxu0 0.0
    %166 = vmatpush1.msra.mxu0 0.0
    %167 = vmatprep.subr.mxu0 0.0
    %168 = vmatpush1.msra.mxu0 0.0
    %169 = vmatprep.subr.mxu0 0.0
    %170 = vmatpush1.msra.mxu0 0.0
    %171 = vmatprep.subr.mxu0 0.0
    %172 = vmatpush1.msra.mxu0 0.0
    %173 = vmatprep.subr.mxu0 0.0
    %174 = vmatpush1.msra.mxu0 0.0
    %175 = vmatprep.subr.mxu0 0.0
    %176 = vmatpush1.msra.mxu0 0.0
    %177 = vmatprep.subr.mxu0 0.0
    %178 = vmatpush1.msra.mxu0 0.0
    %179 = vmatprep.subr.mxu0 0.0
    %180 = vmatpush1.msra.mxu0 0.0
    %181 = vmatprep.subr.mxu0 0.0
    %182 = vmatpush1.msra.mxu0 0.0
    %183 = vmatprep.subr.mxu0 0.0
    %184 = vmatpush1.msra.mxu0 0.0
    %185 = vmatprep.subr.mxu0 0.0
    %186 = vmatpush1.msra.mxu0 0.0
    %187 = vmatprep.subr.mxu0 0.0
    %188 = vmatpush1.msra.mxu0 0.0
    %189 = vmatprep.subr.mxu0 0.0
    %190 = vmatpush1.msra.mxu0 0.0
    %191 = vmatprep.subr.mxu0 0.0
    %192 = vmatpush1.msra.mxu0 0.0
    %193 = vmatprep.subr.mxu0 0.0
    %194 = vmatpush1.msra.mxu0 0.0
    %195 = vmatprep.subr.mxu0 0.0
    %196 = vmatpush1.msra.mxu0 0.0
    %197 = vmatprep.subr.mxu0 0.0
    %198 = vmatpush1.msra.mxu0 0.0
    %199 = vmatprep.subr.mxu0 0.0
    %200 = vmatpush1.msra.mxu0 0.0
    %201 = vmatprep.subr.mxu0 0.0
    %202 = vmatpush1.msra.mxu0 0.0
    %203 = vmatprep.mubr.f32.mxu0 0.0
    %204 = vmatmul.mubr.f32.gmra.mrb[0].mxu0 %v137
    %v205 = vpop.f32.mrb[0].mxu0
    %v206 = vadd.f32 %v133, %v205
    %v207 = vpop.f32.mrb[0].mxu0
    %208 = vdwg.mxu0
    %v209 = vmax.f32 %v206, 0.0
    %v210 = vld [vmem:[%s5] sm:$0xff]
    %v211 = vld [vmem:[%s5 + $0x8] sm:$0xff]
    %v212 = vld [vmem:[%s5 + $0x10] sm:$0xff]
    %v213 = vld [vmem:[%s5 + $0x18] sm:$0xff]
    %v214 = vld [vmem:[%s6] sm:$0x1]
    %v216 = vlaneseq
    %v217 = vshrl.u32 %v216, 7
    %v218 = vsub.s32 0, %v217
    %v219 = vrot.slane %v214, %v218
    %v222 = vsel %vm135, %v209, 0
    %224 = vmatprep.subr.mxu0 0.0
    %225 = vmatpush1.msra.mxu0 %v210
    %226 = vmatprep.subr.mxu0 0.0
    %227 = vmatpush1.msra.mxu0 %v211
    %228 = vmatprep.subr.mxu0 0.0
    %229 = vmatpush1.msra.mxu0 %v212
    %230 = vmatprep.subr.mxu0 0.0
    %231 = vmatpush1.msra.mxu0 %v213
    %232 = vmatprep.subr.mxu0 0.0
    %233 = vmatpush1.msra.mxu0 0.0
    %234 = vmatprep.subr.mxu0 0.0
    %235 = vmatpush1.msra.mxu0 0.0
    %236 = vmatprep.subr.mxu0 0.0
    %237 = vmatpush1.msra.mxu0 0.0
    %238 = vmatprep.subr.mxu0 0.0
    %239 = vmatpush1.msra.mxu0 0.0
    %240 = vmatprep.subr.mxu0 0.0
    %241 = vmatpush1.msra.mxu0 0.0
    %242 = vmatprep.subr.mxu0 0.0
    %243 = vmatpush1.msra.mxu0 0.0
    %244 = vmatprep.subr.mxu0 0.0
    %245 = vmatpush1.msra.mxu0 0.0
    %246 = vmatprep.subr.mxu0 0.0
    %247 = vmatpush1.msra.mxu0 0.0
    %248 = vmatprep.subr.mxu0 0.0
    %249 = vmatpush1.msra.mxu0 0.0
    %250 = vmatprep.subr.mxu0 0.0
    %251 = vmatpush1.msra.mxu0 0.0
    %252 = vmatprep.subr.mxu0 0.0
    %253 = vmatpush1.msra.mxu0 0.0
    %254 = vmatprep.subr.mxu0 0.0
    %255 = vmatpush1.msra.mxu0 0.0
    %256 = vmatprep.subr.mxu0 0.0
    %257 = vmatpush1.msra.mxu0 0.0
    %258 = vmatprep.subr.mxu0 0.0
    %259 = vmatpush1.msra.mxu0 0.0
    %260 = vmatprep.subr.mxu0 0.0
    %261 = vmatpush1.msra.mxu0 0.0
    %262 = vmatprep.subr.mxu0 0.0
    %263 = vmatpush1.msra.mxu0 0.0
    %264 = vmatprep.subr.mxu0 0.0
    %265 = vmatpush1.msra.mxu0 0.0
    %266 = vmatprep.subr.mxu0 0.0
    %267 = vmatpush1.msra.mxu0 0.0
    %268 = vmatprep.subr.mxu0 0.0
    %269 = vmatpush1.msra.mxu0 0.0
    %270 = vmatprep.subr.mxu0 0.0
    %271 = vmatpush1.msra.mxu0 0.0
    %272 = vmatprep.subr.mxu0 0.0
    %273 = vmatpush1.msra.mxu0 0.0
    %274 = vmatprep.subr.mxu0 0.0
    %275 = vmatpush1.msra.mxu0 0.0
    %276 = vmatprep.subr.mxu0 0.0
    %277 = vmatpush1.msra.mxu0 0.0
    %278 = vmatprep.subr.mxu0 0.0
    %279 = vmatpush1.msra.mxu0 0.0
    %280 = vmatprep.subr.mxu0 0.0
    %281 = vmatpush1.msra.mxu0 0.0
    %282 = vmatprep.subr.mxu0 0.0
    %283 = vmatpush1.msra.mxu0 0.0
    %284 = vmatprep.subr.mxu0 0.0
    %285 = vmatpush1.msra.mxu0 0.0
    %286 = vmatprep.subr.mxu0 0.0
    %287 = vmatpush1.msra.mxu0 0.0
    %288 = vmatprep.mubr.f32.mxu0 0.0
    %289 = vmatmul.mubr.f32.gmra.mrb[0].mxu0 %v222
    %v290 = vpop.f32.mrb[0].mxu0
    %v291 = vadd.f32 %v219, %v290
    %v292 = vpop.f32.mrb[0].mxu0
    %293 = vdwg.mxu0
    %vm294 = vcmask 64512
    %295 = vst.msk [vmem:[#allocation5] sm:$0xff] %vm294, %v291
    // Predicated region
    $region34: #{three_layer_relu_net.1} parent=1 // pred_check
      _
    $region35: #{three_layer_relu_net.1} parent=1 // pred_check_branch
      %297 = sbr.rel (0) target = $region37
    $region36: #{three_layer_relu_net.1} parent=1 // pred_region
      %s299 = ssub.s32 128, 128
      %300 = vsyncadd [#allocation4], %s299
      %s302 = sshll.u32 [#allocation5], 4
      %s303 = int_to_ptr.vmem [resolvable:$true] %s302
      %305 = dma.vmem_to_hbm [thread:$0]  %s303, 128, %s7, [#allocation4]
    $region37: #{three_layer_relu_net.1} parent=1 // pred_fallthru
      _
    // Predicated region
    $region38: #{three_layer_relu_net.1} parent=1 // pred_check
      _
    $region39: #{three_layer_relu_net.1} parent=1 // pred_check_branch
      %307 = sbr.rel (0) target = $region41
    $region40: #{three_layer_relu_net.1} parent=1 // pred_region
      %308 = dma.done [#allocation4], 128
    $region41: #{three_layer_relu_net.1} parent=1 // pred_fallthru
      _
    %309 = vsyncpa [#allocation3], 1
    %310 = vsyncpa [#allocation4], 1

</llo_original>
